<compile_context>
chip_gen: v5e
topology: v5e:2x2
jax: 0.10.0
libtpu: 0.0.40
codegen_flags: <defaults>
</compile_context>

<pallas_src>
import jax
import jax.numpy as jnp
from jax.experimental import pallas as pl
from jax.experimental.pallas import tpu as pltpu


def _round_up(n, m):
    return (n + m - 1) // m * m


def _densenet_kernel(x_ref, w_ref, out_ref):
    # x_ref:   (2, TB)   inputs, batch on lanes
    # w_ref:   (H, W)    packed parameter slab (resident, constant block)
    # out_ref: (1, TB)   lane-dense output
    H = w_ref.shape[0]

    x0 = x_ref[0:1, :]                       # (1, TB)
    x1 = x_ref[1:2, :]                       # (1, TB)

    w2h = w_ref[:, 0:H]                      # (H, H)   W2 rows hitting hid1
    w1c = w_ref[:, H:H + 2]                  # (H, 2)   W1
    w2xc = w_ref[:, H + 2:H + 4]             # (H, 2)   W2 rows hitting input
    b1 = w_ref[:, H + 4:H + 5]               # (H, 1)
    b2 = w_ref[:, H + 5:H + 6]               # (H, 1)
    w3h1 = w_ref[:, H + 6:H + 7]             # (H, 1)   W3 coeffs for hid1
    w3h2 = w_ref[:, H + 7:H + 8]             # (H, 1)   W3 coeffs for hid2
    w3x0 = w_ref[0:1, H + 8:H + 9]           # (1, 1)   W3 coeff for x[:,0]
    w3x1 = w_ref[1:2, H + 8:H + 9]           # (1, 1)   W3 coeff for x[:,1]
    b3 = w_ref[2:3, H + 8:H + 9]             # (1, 1)

    # hid1 = tanh(linear1(x)) : K=2, done as broadcast outer-products on the VPU.
    hid1 = jnp.tanh(w1c[:, 0:1] * x0 + w1c[:, 1:2] * x1 + b1)          # (H, TB)

    # hid2 = tanh(linear2(cat([x, hid1]))) : only the HxH piece uses the MXU.
    k = jnp.dot(w2h, hid1, preferred_element_type=jnp.float32)         # (H, TB)
    hid2 = jnp.tanh(k + w2xc[:, 0:1] * x0 + w2xc[:, 1:2] * x1 + b2)    # (H, TB)

    # output = sigmoid(linear3(cat([hid2, hid1, x]))) : N=1 layer done as
    # lane-wise multiply + cross-sublane reduce instead of a degenerate matmul.
    s = w3h2 * hid2 + w3h1 * hid1                                      # (H, TB)
    m = jnp.sum(s, axis=0, keepdims=True)                              # (1, TB)
    m = m + w3x0 * x0 + w3x1 * x1 + b3
    out_ref[...] = jax.nn.sigmoid(m)


def pack_params(params):
    """One-time packing of PyTorch-layout params into a single (H, >=128) slab.

    Column layout: [W2h (H) | W1 (2) | W2x (2) | b1 | b2 | w3_hid1 | w3_hid2 |
                    (rows 0..2 of next col) w3_x0, w3_x1, b3 | zero pad ...]
    No transposes are needed because the kernel works in (features, batch) layout.
    """
    w1 = jnp.asarray(params["w1"], jnp.float32)   # (H, 2)
    b1 = jnp.asarray(params["b1"], jnp.float32)   # (H,)
    w2 = jnp.asarray(params["w2"], jnp.float32)   # (H, H+2)
    b2 = jnp.asarray(params["b2"], jnp.float32)   # (H,)
    w3 = jnp.asarray(params["w3"], jnp.float32)   # (1, 2H+2)
    b3 = jnp.asarray(params["b3"], jnp.float32)   # (1,)

    H = w1.shape[0]
    assert H >= 3, "num_hid must be >= 3 for the packed-scalar column"
    W = max(128, _round_up(H + 9, 128))           # lane-aligned slab width

    slab = jnp.zeros((H, W), jnp.float32)
    slab = slab.at[:, 0:H].set(w2[:, 2:])         # W2 rows that multiply hid1
    slab = slab.at[:, H:H + 2].set(w1)            # W1
    slab = slab.at[:, H + 2:H + 4].set(w2[:, :2]) # W2 rows that multiply input
    slab = slab.at[:, H + 4].set(b1)
    slab = slab.at[:, H + 5].set(b2)
    slab = slab.at[:, H + 6].set(w3[0, H:2 * H])  # W3 coeffs for hid1
    slab = slab.at[:, H + 7].set(w3[0, :H])       # W3 coeffs for hid2
    slab = slab.at[0, H + 8].set(w3[0, 2 * H])    # W3 coeff for x[:,0]
    slab = slab.at[1, H + 8].set(w3[0, 2 * H + 1])# W3 coeff for x[:,1]
    slab = slab.at[2, H + 8].set(b3[0])           # b3
    return slab


def densenet_forward(x, slab, *, block_b=512):
    """x: (B, 2) float32.  slab: packed params from pack_params()."""
    x = jnp.asarray(x, jnp.float32)
    B = x.shape[0]

    # Batch tile: multiple of 128 (lane-dense loads/stores), capped at block_b.
    TB = min(block_b, _round_up(max(B, 1), 128))
    B_pad = _round_up(B, TB)

    # Transposed, zero-padded input: batch on the lane axis.
    x_t = jnp.zeros((2, B_pad), jnp.float32).at[:, :B].set(x.T)

    out_t = pl.pallas_call(
        _densenet_kernel,
        out_shape=jax.ShapeDtypeStruct((1, B_pad), jnp.float32),
        grid=(B_pad // TB,),
        in_specs=[
            pl.BlockSpec((2, TB), lambda i: (0, i)),            # x tile (pipelined)
            pl.BlockSpec(slab.shape, lambda i: (0, 0)),         # weights resident
        ],
        out_specs=pl.BlockSpec((1, TB), lambda i: (0, i)),      # lane-dense out
        compiler_params=pltpu.CompilerParams(
            dimension_semantics=("parallel",)),
    )(x_t, slab)

    return out_t[0, :B].reshape(B, 1)


def densenet_reference(x, params):
    """Pure-JAX reference mirroring the PyTorch forward exactly."""
    h1 = jnp.tanh(x @ params["w1"].T + params["b1"])
    j = jnp.concatenate([x, h1], axis=1)
    h2 = jnp.tanh(j @ params["w2"].T + params["b2"])
    l = jnp.concatenate([h2, h1, x], axis=1)
    return jax.nn.sigmoid(l @ params["w3"].T + params["b3"])


def init_params(key, num_hid):
    """Deterministic parameter init (PyTorch weight layout: (out, in))."""
    ks = jax.random.split(key, 6)

    def u(k, shape, fan_in):
        bound = 1.0 / jnp.sqrt(fan_in)
        return jax.random.uniform(k, shape, jnp.float32, -bound, bound)

    return {
        "w1": u(ks[0], (num_hid, 2), 2),
        "b1": u(ks[1], (num_hid,), 2),
        "w2": u(ks[2], (num_hid, num_hid + 2), num_hid + 2),
        "b2": u(ks[3], (num_hid,), num_hid + 2),
        "w3": u(ks[4], (1, 2 * num_hid + 2), 2 * num_hid + 2),
        "b3": u(ks[5], (1,), 2 * num_hid + 2),
    }


if __name__ == "__main__":
    num_hid = 32
    batch = 8

    key = jax.random.PRNGKey(0)
    k_x, k_p = jax.random.split(key)
    x = jax.random.normal(k_x, (batch, 2), jnp.float32)
    params = init_params(k_p, num_hid)

    slab = pack_params(params)  # packed ONCE, reused across calls

    out = jax.block_until_ready(densenet_forward(x, slab))
    ref = densenet_reference(x, params)
    assert out.shape == (batch, 1)
    assert jnp.allclose(out, ref, atol=1e-5, rtol=1e-5), "mismatch vs reference (B=8)"

    # Exercise the batch grid, padding/trim and pipelining path (grid of 2 tiles).
    x_big = jax.random.normal(jax.random.PRNGKey(3), (1000, 2), jnp.float32)
    out_big = jax.block_until_ready(densenet_forward(x_big, slab))
    ref_big = densenet_reference(x_big, params)
    assert out_big.shape == (1000, 1)
    assert jnp.allclose(out_big, ref_big, atol=1e-5, rtol=1e-5), "mismatch vs reference (B=1000)"

    print("KERNEL_OK")
</pallas_src>

<mosaic_0001>
module attributes {stable_mosaic.version = 11 : i64} {
  func.func @_densenet_kernel(%arg0: i32, %arg1: memref<2x128xf32, #tpu.memory_space<vmem>>, %arg2: memref<32x128xf32, #tpu.memory_space<vmem>>, %arg3: memref<1x128xf32, #tpu.memory_space<vmem>>) attributes {dimension_semantics = [#tpu.dimension_semantics<parallel>], iteration_bounds = array<i64: 1>, scalar_prefetch = 0 : i64, scratch_operands = 0 : i64, tpu.core_type = #tpu.core_type<tc>, window_params = [{transform_indices = @transform_0, window_bounds = array<i64: 2, 128>}, {pipeline_mode = #tpu.pipeline_mode<synchronous>, transform_indices = @transform_1, window_bounds = array<i64: 32, 128>}, {transform_indices = @transform_2, window_bounds = array<i64: 1, 128>}]} {
    %c0 = arith.constant 0 : index
    %c0_0 = arith.constant 0 : index
    %0 = vector.load %arg1[%c0, %c0_0] : memref<2x128xf32, #tpu.memory_space<vmem>>, vector<1x128xf32>
    %c1 = arith.constant 1 : index
    %c0_1 = arith.constant 0 : index
    %1 = vector.load %arg1[%c1, %c0_1] : memref<2x128xf32, #tpu.memory_space<vmem>>, vector<1x128xf32>
    %c0_2 = arith.constant 0 : index
    %c0_3 = arith.constant 0 : index
    %2 = vector.load %arg2[%c0_2, %c0_3] : memref<32x128xf32, #tpu.memory_space<vmem>>, vector<32x32xf32>
    %c0_4 = arith.constant 0 : index
    %c32 = arith.constant 32 : index
    %3 = vector.load %arg2[%c0_4, %c32] : memref<32x128xf32, #tpu.memory_space<vmem>>, vector<32x2xf32>
    %c0_5 = arith.constant 0 : index
    %c34 = arith.constant 34 : index
    %4 = vector.load %arg2[%c0_5, %c34] : memref<32x128xf32, #tpu.memory_space<vmem>>, vector<32x2xf32>
    %c0_6 = arith.constant 0 : index
    %c36 = arith.constant 36 : index
    %5 = vector.load %arg2[%c0_6, %c36] : memref<32x128xf32, #tpu.memory_space<vmem>>, vector<32x1xf32>
    %c0_7 = arith.constant 0 : index
    %c37 = arith.constant 37 : index
    %6 = vector.load %arg2[%c0_7, %c37] : memref<32x128xf32, #tpu.memory_space<vmem>>, vector<32x1xf32>
    %c0_8 = arith.constant 0 : index
    %c38 = arith.constant 38 : index
    %7 = vector.load %arg2[%c0_8, %c38] : memref<32x128xf32, #tpu.memory_space<vmem>>, vector<32x1xf32>
    %c0_9 = arith.constant 0 : index
    %c39 = arith.constant 39 : index
    %8 = vector.load %arg2[%c0_9, %c39] : memref<32x128xf32, #tpu.memory_space<vmem>>, vector<32x1xf32>
    %c0_10 = arith.constant 0 : index
    %c40 = arith.constant 40 : index
    %9 = vector.load %arg2[%c0_10, %c40] : memref<32x128xf32, #tpu.memory_space<vmem>>, vector<1x1xf32>
    %c1_11 = arith.constant 1 : index
    %c40_12 = arith.constant 40 : index
    %10 = vector.load %arg2[%c1_11, %c40_12] : memref<32x128xf32, #tpu.memory_space<vmem>>, vector<1x1xf32>
    %c2 = arith.constant 2 : index
    %c40_13 = arith.constant 40 : index
    %11 = vector.load %arg2[%c2, %c40_13] : memref<32x128xf32, #tpu.memory_space<vmem>>, vector<1x1xf32>
    %12 = vector.extract_strided_slice %3 {offsets = [0, 0], sizes = [32, 1], strides = [1, 1]} : vector<32x2xf32> to vector<32x1xf32>
    %13 = vector.broadcast %12 : vector<32x1xf32> to vector<32x128xf32>
    %14 = vector.broadcast %0 : vector<1x128xf32> to vector<32x128xf32>
    %15 = arith.mulf %13, %14 : vector<32x128xf32>
    %16 = vector.extract_strided_slice %3 {offsets = [0, 1], sizes = [32, 1], strides = [1, 1]} : vector<32x2xf32> to vector<32x1xf32>
    %17 = vector.broadcast %16 : vector<32x1xf32> to vector<32x128xf32>
    %18 = vector.broadcast %1 : vector<1x128xf32> to vector<32x128xf32>
    %19 = arith.mulf %17, %18 : vector<32x128xf32>
    %20 = arith.addf %15, %19 : vector<32x128xf32>
    %21 = vector.broadcast %5 : vector<32x1xf32> to vector<32x128xf32>
    %22 = arith.addf %20, %21 : vector<32x128xf32>
    %23 = math.tanh %22 : vector<32x128xf32>
    %cst = arith.constant dense<0.000000e+00> : vector<32x128xf32>
    %24 = tpu.matmul %2, %23, %cst {dimension_numbers = #tpu.dot_dimension_numbers<[1], [0], [0], [1], [0, 0, 1, 1], [], []>} : vector<32x32xf32>, vector<32x128xf32>, vector<32x128xf32> -> vector<32x128xf32>
    %25 = vector.extract_strided_slice %4 {offsets = [0, 0], sizes = [32, 1], strides = [1, 1]} : vector<32x2xf32> to vector<32x1xf32>
    %26 = vector.broadcast %25 : vector<32x1xf32> to vector<32x128xf32>
    %27 = vector.broadcast %0 : vector<1x128xf32> to vector<32x128xf32>
    %28 = arith.mulf %26, %27 : vector<32x128xf32>
    %29 = arith.addf %24, %28 : vector<32x128xf32>
    %30 = vector.extract_strided_slice %4 {offsets = [0, 1], sizes = [32, 1], strides = [1, 1]} : vector<32x2xf32> to vector<32x1xf32>
    %31 = vector.broadcast %30 : vector<32x1xf32> to vector<32x128xf32>
    %32 = vector.broadcast %1 : vector<1x128xf32> to vector<32x128xf32>
    %33 = arith.mulf %31, %32 : vector<32x128xf32>
    %34 = arith.addf %29, %33 : vector<32x128xf32>
    %35 = vector.broadcast %6 : vector<32x1xf32> to vector<32x128xf32>
    %36 = arith.addf %34, %35 : vector<32x128xf32>
    %37 = math.tanh %36 : vector<32x128xf32>
    %38 = vector.broadcast %8 : vector<32x1xf32> to vector<32x128xf32>
    %39 = arith.mulf %38, %37 : vector<32x128xf32>
    %40 = vector.broadcast %7 : vector<32x1xf32> to vector<32x128xf32>
    %41 = arith.mulf %40, %23 : vector<32x128xf32>
    %42 = arith.addf %39, %41 : vector<32x128xf32>
    %cst_14 = arith.constant dense<0.000000e+00> : vector<128xf32>
    %43 = vector.multi_reduction <add>, %42, %cst_14 [0] : vector<32x128xf32> to vector<128xf32>
    %44 = vector.shape_cast %43 : vector<128xf32> to vector<1x128xf32>
    %45 = vector.broadcast %9 : vector<1x1xf32> to vector<1x128xf32>
    %46 = arith.mulf %45, %0 : vector<1x128xf32>
    %47 = arith.addf %44, %46 : vector<1x128xf32>
    %48 = vector.broadcast %10 : vector<1x1xf32> to vector<1x128xf32>
    %49 = arith.mulf %48, %1 : vector<1x128xf32>
    %50 = arith.addf %47, %49 : vector<1x128xf32>
    %51 = vector.broadcast %11 : vector<1x1xf32> to vector<1x128xf32>
    %52 = arith.addf %50, %51 : vector<1x128xf32>
    %53 = arith.negf %52 : vector<1x128xf32>
    %54 = math.exp %53 : vector<1x128xf32>
    %cst_15 = arith.constant 1.000000e+00 : f32
    %55 = vector.broadcast %cst_15 : f32 to vector<1x128xf32>
    %56 = arith.addf %55, %54 : vector<1x128xf32>
    %57 = arith.divf %55, %56 : vector<1x128xf32>
    %c0_16 = arith.constant 0 : index
    %c0_17 = arith.constant 0 : index
    %58 = vector.load %arg3[%c0_16, %c0_17] : memref<1x128xf32, #tpu.memory_space<vmem>>, vector<1x128xf32>
    tpu.vector_store %arg3[%c0_16, %c0_17], %57 {strides = array<i32>} : memref<1x128xf32, #tpu.memory_space<vmem>>, vector<1x128xf32>,
    return
  }
  func.func @transform_0(%arg0: i32) -> (i32, i32) {
    %c0_i32 = arith.constant 0 : i32
    %c0_i32_0 = arith.constant 0 : i32
    return %c0_i32, %arg0 : i32, i32
  }
  func.func @transform_1(%arg0: i32) -> (i32, i32) {
    %c0_i32 = arith.constant 0 : i32
    %c0_i32_0 = arith.constant 0 : i32
    %c0_i32_1 = arith.constant 0 : i32
    return %c0_i32, %c0_i32_0 : i32, i32
  }
  func.func @transform_2(%arg0: i32) -> (i32, i32) {
    %c0_i32 = arith.constant 0 : i32
    %c0_i32_0 = arith.constant 0 : i32
    return %c0_i32, %arg0 : i32, i32
  }
}

</mosaic_0001>

<llo_original>
// kernel: tpu_custom_call.1
$region0: #{tpu_custom_call.1}
  #allocation0 [shape = 'u32[]', space=smem, size = 0x4, offset = 0x4, fixed_abs, tag = 'smem constant byte address 0x4 - core index']
  #allocation1 [shape = 'u32[72,128]{1,0:T(1,128)}', space=vmem, size = 0x9000, scoped, tag = 'internal scratch']
  %s0 = inlined_call_operand.hbm [shape: f32[2,128], index: 0, kind: input, shape index: {}]
  %s1 = inlined_call_operand.hbm [shape: f32[32,128], index: 1, kind: input, shape index: {}]
  %s2 = inlined_call_operand.hbm [shape: f32[1,128], index: 2, kind: output, shape index: {}]
  %s3 = sld [smem:[#allocation0]]
  $region26: #{tpu_custom_call.1} parent=0
    _
  %s5 = ssub.s32 1, %s3
  %s6 = scalar_select 0, %s5, %s3
  $region1: #{tpu_custom_call.1} parent=0
    #allocation2 [shape = 'u8[1024]{0}', space=vmem, size = 0x400, scoped, tag = 'input window, operand 0, single buffered']
    #allocation3 [shape = 's32[1]{0}', space=sflag, size = 0x4, scoped, tag = 'scoped memory for tpu_custom_call.1']
    #allocation4 [shape = 's32[1]{0}', space=sflag, size = 0x4, scoped, tag = 'scoped memory for tpu_custom_call.1']
    #allocation5 [shape = 'u8[16384]{0}', space=vmem, size = 0x4000, scoped, tag = 'input window, operand 1, single buffered']
    #allocation6 [shape = 's32[1]{0}', space=sflag, size = 0x4, scoped, tag = 'scoped memory for tpu_custom_call.1']
    #allocation7 [shape = 'u8[512]{0}', space=vmem, size = 0x400, scoped, tag = 'output window, operand 0, single buffered']
    %7 = vsyncpa [#allocation3], 0
    %8 = vsyncpa [#allocation6], 0
    %9 = vsyncpa [#allocation4], 0
    // Predicated region
    $region2: #{tpu_custom_call.1} parent=1 // pred_check
      _
    $region3: #{tpu_custom_call.1} parent=1 // pred_check_branch
      %11 = sbr.rel (0) target = $region5
    $region4: #{tpu_custom_call.1} parent=1 // pred_region
      %13 = vsyncadd [#allocation3], 0
      %s15 = sshll.u32 %s0, 4
      %s16 = int_to_ptr.hbm [resolvable:$true] %s15
      %s17 = sshll.u32 [#allocation2], 4
      %s18 = int_to_ptr.vmem [resolvable:$true] %s17
      %20 = dma.hbm_to_vmem [thread:$0]  %s16, 32, %s18, [#allocation3]
    $region5: #{tpu_custom_call.1} parent=1 // pred_fallthru
      _
    // Predicated region
    $region6: #{tpu_custom_call.1} parent=1 // pred_check
      _
    $region7: #{tpu_custom_call.1} parent=1 // pred_check_branch
      %22 = sbr.rel (0) target = $region9
    $region8: #{tpu_custom_call.1} parent=1 // pred_region
      %24 = vsyncadd [#allocation6], 0
      %s25 = sshll.u32 %s1, 4
      %s26 = int_to_ptr.hbm [resolvable:$true] %s25
      %s27 = sshll.u32 [#allocation5], 4
      %s28 = int_to_ptr.vmem [resolvable:$true] %s27
      %33 = dma.hbm_to_vmem [thread:$0]  %s26, 512, %s28, [#allocation6], 128, 128, 8
    $region9: #{tpu_custom_call.1} parent=1 // pred_fallthru
      _
    // Predicated region
    $region10: #{tpu_custom_call.1} parent=1 // pred_check
      _
    $region11: #{tpu_custom_call.1} parent=1 // pred_check_branch
      %35 = sbr.rel (0) target = $region13
    $region12: #{tpu_custom_call.1} parent=1 // pred_region
      %37 = dma.done [#allocation3], 32
    $region13: #{tpu_custom_call.1} parent=1 // pred_fallthru
      _
    // Predicated region
    $region14: #{tpu_custom_call.1} parent=1 // pred_check
      _
    $region15: #{tpu_custom_call.1} parent=1 // pred_check_branch
      %39 = sbr.rel (0) target = $region17
    $region16: #{tpu_custom_call.1} parent=1 // pred_region
      %41 = dma.done [#allocation6], 512
    $region17: #{tpu_custom_call.1} parent=1 // pred_fallthru
      _
    %v42 = vld [vmem:[#allocation2] sm:$0x1]
    %v43 = vld [vmem:[#allocation2 + $0x1] sm:$0x1]
    %v44 = vld [vmem:[#allocation5] sm:$0xff]
    %v45 = vld [vmem:[#allocation5 + $0x8] sm:$0xff]
    %v46 = vld [vmem:[#allocation5 + $0x10] sm:$0xff]
    %v47 = vld [vmem:[#allocation5 + $0x18] sm:$0xff]
    %v48 = vld [vmem:[#allocation5] sm:$0x1]
    %v49 = vld [vmem:[#allocation5 + $0x1] sm:$0x1]
    %v50 = vld [vmem:[#allocation5 + $0x2] sm:$0x1]
    %52 = vset.pattern.permute.xlu0 32
    %53 = vperm.xlu0 %52, %v44
    %v54 = vpop.permute.xlu0 %53
    %57 = vset.pattern.permute.xlu0 32
    %58 = vperm.xlu0 %57, %v45
    %v59 = vpop.permute.xlu0 %58
    %62 = vset.pattern.permute.xlu0 32
    %63 = vperm.xlu0 %62, %v46
    %v64 = vpop.permute.xlu0 %63
    %67 = vset.pattern.permute.xlu0 32
    %68 = vperm.xlu0 %67, %v47
    %v69 = vpop.permute.xlu0 %68
    %v71 = vperm.slane %v42, 0
    %v72 = vmul.f32 %v54, %v71
    %v73 = vmul.f32 %v59, %v71
    %v74 = vmul.f32 %v64, %v71
    %v75 = vmul.f32 %v69, %v71
    %76 = vset.pattern.permute.xlu0 33
    %77 = vperm.xlu0 %76, %v44
    %v78 = vpop.permute.xlu0 %77
    %80 = vset.pattern.permute.xlu0 33
    %81 = vperm.xlu0 %80, %v45
    %v82 = vpop.permute.xlu0 %81
    %84 = vset.pattern.permute.xlu0 33
    %85 = vperm.xlu0 %84, %v46
    %v86 = vpop.permute.xlu0 %85
    %88 = vset.pattern.permute.xlu0 33
    %89 = vperm.xlu0 %88, %v47
    %v90 = vpop.permute.xlu0 %89
    %v92 = vperm.slane %v43, 0
    %v93 = vmul.f32 %v78, %v92
    %v94 = vmul.f32 %v82, %v92
    %v95 = vmul.f32 %v86, %v92
    %v96 = vmul.f32 %v90, %v92
    %v97 = vadd.f32 %v72, %v93
    %v98 = vadd.f32 %v73, %v94
    %v99 = vadd.f32 %v74, %v95
    %v100 = vadd.f32 %v75, %v96
    %101 = vset.pattern.permute.xlu0 36
    %102 = vperm.xlu0 %101, %v44
    %v103 = vpop.permute.xlu0 %102
    %105 = vset.pattern.permute.xlu0 36
    %106 = vperm.xlu0 %105, %v45
    %v107 = vpop.permute.xlu0 %106
    %109 = vset.pattern.permute.xlu0 36
    %110 = vperm.xlu0 %109, %v46
    %v111 = vpop.permute.xlu0 %110
    %113 = vset.pattern.permute.xlu0 36
    %114 = vperm.xlu0 %113, %v47
    %v115 = vpop.permute.xlu0 %114
    %v117 = vadd.f32 %v97, %v103
    %v118 = vadd.f32 %v98, %v107
    %v119 = vadd.f32 %v99, %v111
    %v120 = vadd.f32 %v100, %v115
    %v121 = vtanh.pop %v117
    %v122 = vtanh.pop %v118
    %v123 = vtanh.pop %v119
    %v124 = vtanh.pop %v120
    %125 = vset.pattern.permute.xlu0 34
    %126 = vperm.xlu0 %125, %v44
    %v127 = vpop.permute.xlu0 %126
    %129 = vset.pattern.permute.xlu0 34
    %130 = vperm.xlu0 %129, %v45
    %v131 = vpop.permute.xlu0 %130
    %133 = vset.pattern.permute.xlu0 34
    %134 = vperm.xlu0 %133, %v46
    %v135 = vpop.permute.xlu0 %134
    %137 = vset.pattern.permute.xlu0 34
    %138 = vperm.xlu0 %137, %v47
    %v139 = vpop.permute.xlu0 %138
    %v141 = vmul.f32 %v127, %v71
    %v142 = vmul.f32 %v131, %v71
    %v143 = vmul.f32 %v135, %v71
    %v144 = vmul.f32 %v139, %v71
    %vm145 = vcmask 261120
    %v146 = vsel %vm145, %v44, 0
    %v148 = vsel %vm145, %v45, 0
    %v150 = vsel %vm145, %v46, 0
    %v152 = vsel %vm145, %v47, 0
    %154 = vmatpush.msra.mxu0 0.0
    %155 = vmatpush.msra.mxu0 0.0
    %156 = vmatpush.msra.mxu0 0.0
    %157 = vmatpush.msra.mxu0 0.0
    %158 = vmatpush.msra.mxu0 0.0
    %159 = vmatpush.msra.mxu0 0.0
    %160 = vmatpush.msra.mxu0 0.0
    %161 = vmatpush.msra.mxu0 0.0
    %162 = vmatpush.msra.mxu0 0.0
    %163 = vmatpush.msra.mxu0 0.0
    %164 = vmatpush.msra.mxu0 0.0
    %165 = vmatpush.msra.mxu0 0.0
    %166 = vmatpush.msra.mxu0 %v124
    %167 = vmatpush.msra.mxu0 %v123
    %168 = vmatpush.msra.mxu0 %v122
    %169 = vmatpush.msra.mxu0 %v121
    %170 = vmatmul.f32.gmra.mxu0 %v146
    %v171 = vpop.f32.mrf.mxu0
    %v172 = vadd.f32 %v141, %v171
    %173 = vmatmul.f32.gmra.mxu0 %v148
    %v174 = vpop.f32.mrf.mxu0
    %v175 = vadd.f32 %v142, %v174
    %176 = vmatmul.f32.gmra.mxu0 %v150
    %v177 = vpop.f32.mrf.mxu0
    %v178 = vadd.f32 %v143, %v177
    %179 = vmatmul.f32.gmra.mxu0 %v152
    %v180 = vpop.f32.mrf.mxu0
    %v181 = vadd.f32 %v144, %v180
    %182 = vdwg.mxu0
    %183 = vset.pattern.permute.xlu0 35
    %184 = vperm.xlu0 %183, %v44
    %v185 = vpop.permute.xlu0 %184
    %187 = vset.pattern.permute.xlu0 35
    %188 = vperm.xlu0 %187, %v45
    %v189 = vpop.permute.xlu0 %188
    %191 = vset.pattern.permute.xlu0 35
    %192 = vperm.xlu0 %191, %v46
    %v193 = vpop.permute.xlu0 %192
    %195 = vset.pattern.permute.xlu0 35
    %196 = vperm.xlu0 %195, %v47
    %v197 = vpop.permute.xlu0 %196
    %v199 = vmul.f32 %v185, %v92
    %v200 = vmul.f32 %v189, %v92
    %v201 = vmul.f32 %v193, %v92
    %v202 = vmul.f32 %v197, %v92
    %v203 = vadd.f32 %v172, %v199
    %v204 = vadd.f32 %v175, %v200
    %v205 = vadd.f32 %v178, %v201
    %v206 = vadd.f32 %v181, %v202
    %207 = vset.pattern.permute.xlu0 37
    %208 = vperm.xlu0 %207, %v44
    %v209 = vpop.permute.xlu0 %208
    %211 = vset.pattern.permute.xlu0 37
    %212 = vperm.xlu0 %211, %v45
    %v213 = vpop.permute.xlu0 %212
    %215 = vset.pattern.permute.xlu0 37
    %216 = vperm.xlu0 %215, %v46
    %v217 = vpop.permute.xlu0 %216
    %219 = vset.pattern.permute.xlu0 37
    %220 = vperm.xlu0 %219, %v47
    %v221 = vpop.permute.xlu0 %220
    %v223 = vadd.f32 %v203, %v209
    %v224 = vadd.f32 %v204, %v213
    %v225 = vadd.f32 %v205, %v217
    %v226 = vadd.f32 %v206, %v221
    %v227 = vtanh.pop %v223
    %v228 = vtanh.pop %v224
    %v229 = vtanh.pop %v225
    %v230 = vtanh.pop %v226
    %231 = vset.pattern.permute.xlu0 39
    %232 = vperm.xlu0 %231, %v44
    %v233 = vpop.permute.xlu0 %232
    %235 = vset.pattern.permute.xlu0 39
    %236 = vperm.xlu0 %235, %v45
    %v237 = vpop.permute.xlu0 %236
    %239 = vset.pattern.permute.xlu0 39
    %240 = vperm.xlu0 %239, %v46
    %v241 = vpop.permute.xlu0 %240
    %243 = vset.pattern.permute.xlu0 39
    %244 = vperm.xlu0 %243, %v47
    %v245 = vpop.permute.xlu0 %244
    %v247 = vmul.f32 %v233, %v227
    %v248 = vmul.f32 %v237, %v228
    %v249 = vmul.f32 %v241, %v229
    %v250 = vmul.f32 %v245, %v230
    %251 = vset.pattern.permute.xlu0 38
    %252 = vperm.xlu0 %251, %v44
    %v253 = vpop.permute.xlu0 %252
    %255 = vset.pattern.permute.xlu0 38
    %256 = vperm.xlu0 %255, %v45
    %v257 = vpop.permute.xlu0 %256
    %259 = vset.pattern.permute.xlu0 38
    %260 = vperm.xlu0 %259, %v46
    %v261 = vpop.permute.xlu0 %260
    %263 = vset.pattern.permute.xlu0 38
    %264 = vperm.xlu0 %263, %v47
    %v265 = vpop.permute.xlu0 %264
    %v267 = vmul.f32 %v253, %v121
    %v268 = vmul.f32 %v257, %v122
    %v269 = vmul.f32 %v261, %v123
    %v270 = vmul.f32 %v265, %v124
    %v271 = vadd.f32 %v247, %v267
    %v272 = vadd.f32 %v248, %v268
    %v273 = vadd.f32 %v249, %v269
    %v274 = vadd.f32 %v250, %v270
    %v275 = vadd.f32 %v271, %v272
    %v276 = vadd.f32 %v275, %v273
    %v277 = vadd.f32 %v276, %v274
    %v278 = vrot.slane %v277, 4
    %v279 = vadd.f32 %v277, %v278
    %v280 = vrot.slane %v279, 2
    %v281 = vadd.f32 %v279, %v280
    %v282 = vrot.slane %v281, 1
    %v283 = vadd.f32 %v281, %v282
    %285 = vset.pattern.permute.xlu0 40
    %286 = vperm.xlu0 %285, %v48
    %v287 = vpop.permute.xlu0 %286
    %v289 = vmul.f32 %v287, %v42
    %v290 = vadd.f32 %v283, %v289
    %292 = vset.pattern.permute.xlu0 40
    %293 = vperm.xlu0 %292, %v49
    %v294 = vpop.permute.xlu0 %293
    %v296 = vmul.f32 %v294, %v43
    %v297 = vadd.f32 %v290, %v296
    %299 = vset.pattern.permute.xlu0 40
    %300 = vperm.xlu0 %299, %v50
    %v301 = vpop.permute.xlu0 %300
    %v303 = vadd.f32 %v297, %v301
    %v304 = vxor.u32 %v303, 2147483648
    %v305 = vmul.f32 %v304, 1.442695
    %v306 = vpow.pop %v305
    %v307 = vadd.f32 %v306, 1.0
    %v308 = vrcp.pop %v307
    %v309 = vmul.f32 %v307, %v308
    %v310 = vsub.f32 1.0, %v309
    %v311 = vmul.f32 %v308, %v310
    %v312 = vadd.f32 %v308, %v311
    %vm313 = vweird.f32 %v307
    %vm314 = vweird.f32 %v308
    %vm315 = vmor %vm313, %vm314
    %v316 = vsel %vm315, %v308, %v312
    %v317 = vand.u32 2147483647, %v307
    %vm318 = vcmp.eq.f32.partialorder %v317, 8.507059e+37
    %v319 = vand.u32 %v307, 2147483648
    %v320 = vor.u32 1.1754944e-38, %v319
    %v321 = vsel %vm318, %v320, %v316
    %v322 = vmul.f32 1.0, %v321
    %323 = vst [vmem:[#allocation7] sm:$0x1] %v322
    // Predicated region
    $region18: #{tpu_custom_call.1} parent=1 // pred_check
      _
    $region19: #{tpu_custom_call.1} parent=1 // pred_check_branch
      %325 = sbr.rel (0) target = $region21
    $region20: #{tpu_custom_call.1} parent=1 // pred_region
      %327 = vsyncadd [#allocation4], 0
      %s329 = sshll.u32 [#allocation7], 4
      %s330 = int_to_ptr.vmem [resolvable:$true] %s329
      %s331 = sshll.u32 %s2, 4
      %s332 = int_to_ptr.hbm [resolvable:$true] %s331
      %334 = dma.vmem_to_hbm [thread:$0]  %s330, 16, %s332, [#allocation4]
    $region21: #{tpu_custom_call.1} parent=1 // pred_fallthru
      _
    // Predicated region
    $region22: #{tpu_custom_call.1} parent=1 // pred_check
      _
    $region23: #{tpu_custom_call.1} parent=1 // pred_check_branch
      %336 = sbr.rel (0) target = $region25
    $region24: #{tpu_custom_call.1} parent=1 // pred_region
      %338 = dma.done [#allocation4], 16
    $region25: #{tpu_custom_call.1} parent=1 // pred_fallthru
      _
    %339 = vsyncpa [#allocation3], 1
    %340 = vsyncpa [#allocation6], 1
    %341 = vsyncpa [#allocation4], 1

</llo_original>
